<compile_context>
chip_gen: v7x
topology: tpu7x:2x2x1
jax: 0.10.0
libtpu: 0.0.40
codegen_flags: <defaults>
</compile_context>

<pallas_src>
import functools

import jax
import jax.numpy as jnp
from jax.experimental import pallas as pl
from jax.experimental.pallas import tpu as pltpu

_LANES = 128


def _drop_path_kernel(u_ref, x_ref, o_ref, *, keep_prob):
    # u_ref: (B,) f32 in SMEM (scalar-prefetched per-sample uniforms)
    # x_ref/o_ref: (1, TR, 128) VMEM tile of the lane-dense per-sample view
    b = pl.program_id(0)                      # batch axis only (axis 1 is row tiles)
    u = u_ref[b]
    mask = jnp.floor(keep_prob + u)           # 1.0 keep / 0.0 drop, in f32
    scale = mask * (1.0 / keep_prob)          # keep in f32: no low-precision rounding bias
    o_ref[...] = (x_ref[...].astype(jnp.float32) * scale).astype(o_ref.dtype)


def _row_tile(num_rows, itemsize):
    """Pick a row-tile size: packed-sublane aligned, VMEM-budgeted, large DMAs."""
    # sublane packing: 8 rows for 4-byte, 16 for 2-byte, 32 for 1-byte dtypes
    pack = 8 * max(1, 4 // itemsize)
    # in + out, double-buffered => 4 * TR * 128 * itemsize; cap at ~8 MiB total
    budget_rows = (8 * 1024 * 1024) // (4 * _LANES * itemsize)
    tr = min(num_rows, budget_rows)
    if tr >= pack:
        tr = (tr // pack) * pack              # multiple of the packing factor
    else:
        tr = num_rows                          # full-extent block is always legal
    return max(tr, 1)


def drop_path(x, drop_prob, *, training, key):
    """Pallas DropPath. x: (B, ...) — per-sample keep/drop broadcast over trailing dims."""
    if drop_prob is None or drop_prob == 0.0 or not training:
        return x

    keep_prob = 1.0 - float(drop_prob)
    orig_shape = x.shape
    B = orig_shape[0]

    # Per-sample uniforms, deterministic from key (glue / setup), prefetched to SMEM.
    u = jax.random.uniform(key, (B,), dtype=jnp.float32)

    # --- Layout plumbing: lane-dense (last dim = 128) view of each sample. ----
    flat = x.reshape(B, -1)
    E = flat.shape[1]
    pad = (-E) % _LANES
    if pad:
        flat = jnp.pad(flat, ((0, 0), (0, pad)))
    Ep = E + pad
    R = Ep // _LANES
    x3 = flat.reshape(B, R, _LANES)

    itemsize = jnp.dtype(x.dtype).itemsize
    TR = _row_tile(R, itemsize)
    n_row_tiles = pl.cdiv(R, TR)

    kernel = functools.partial(_drop_path_kernel, keep_prob=keep_prob)

    out3 = pl.pallas_call(
        kernel,
        out_shape=jax.ShapeDtypeStruct((B, R, _LANES), x.dtype),
        grid_spec=pltpu.PrefetchScalarGridSpec(
            num_scalar_prefetch=1,
            grid=(B, n_row_tiles),
            in_specs=[
                pl.BlockSpec((1, TR, _LANES), lambda b, r, u_ref: (b, r, 0)),
            ],
            out_specs=pl.BlockSpec((1, TR, _LANES), lambda b, r, u_ref: (b, r, 0)),
        ),
        compiler_params=pltpu.CompilerParams(
            dimension_semantics=("parallel", "parallel"),
        ),
    )(u, x3)

    out = out3.reshape(B, Ep)
    if pad:
        out = out[:, :E]
    return out.reshape(orig_shape)


class DropPath:
    """Mirror of the PyTorch DropPath module (stochastic depth per sample)."""

    def __init__(self, drop_prob=None):
        self.drop_prob = drop_prob
        self.training = True

    def __call__(self, x, key):
        return drop_path(x, self.drop_prob, training=self.training, key=key)


if __name__ == "__main__":
    key = jax.random.PRNGKey(0)
    kx, kd, kx2 = jax.random.split(key, 3)

    # ---- main f32 path: (B, N, D) with lane-dense flattened size ------------
    B, N, D = 2, 8, 32
    x = jax.random.normal(kx, (B, N, D), dtype=jnp.float32)

    module = DropPath(drop_prob=0.5)
    y = jax.block_until_ready(module(x, kd))
    assert y.shape == x.shape and y.dtype == x.dtype

    keep_prob = 0.5
    u = jax.random.uniform(kd, (B,), dtype=jnp.float32)
    mask = jnp.floor(keep_prob + u).reshape(B, 1, 1)
    y_ref = x / keep_prob * mask
    assert jnp.allclose(y, y_ref, atol=1e-6), "f32 mismatch vs reference"

    # ---- padded path: trailing size not a multiple of 128 -------------------
    xo = jax.random.normal(kx2, (B, 7, 5), dtype=jnp.float32)
    module2 = DropPath(drop_prob=0.25)
    yo = jax.block_until_ready(module2(xo, kd))
    keep_prob2 = 0.75
    mask2 = jnp.floor(keep_prob2 + u).reshape(B, 1, 1)
    yo_ref = xo / keep_prob2 * mask2
    assert jnp.allclose(yo, yo_ref, rtol=1e-5, atol=1e-6), "padded-path mismatch"

    # ---- bf16 path: multiply runs in f32, only the result is cast -----------
    x_bf16 = x.astype(jnp.bfloat16)
    y_bf16 = jax.block_until_ready(module(x_bf16, kd))
    assert y_bf16.dtype == jnp.bfloat16
    y_bf16_ref = (x_bf16.astype(jnp.float32) * (mask / keep_prob)).astype(jnp.bfloat16)
    assert jnp.allclose(y_bf16.astype(jnp.float32), y_bf16_ref.astype(jnp.float32),
                        rtol=1e-2, atol=1e-2), "bf16 mismatch vs f32-scaled reference"

    # ---- eval path (training=False): identity --------------------------------
    module.training = False
    y_eval = jax.block_until_ready(module(x, kd))
    assert jnp.allclose(y_eval, x), "eval mode should be identity"

    # ---- drop_prob == 0: identity ---------------------------------------------
    module0 = DropPath(drop_prob=0.0)
    y0 = jax.block_until_ready(module0(x, kd))
    assert jnp.allclose(y0, x), "drop_prob=0 should be identity"

    print("KERNEL_OK")
</pallas_src>

<mosaic_0001>
module attributes {stable_mosaic.version = 11 : i64} {
  func.func @_drop_path_kernel(%arg0: i32, %arg1: i32, %arg2: memref<2xf32, #tpu.memory_space<smem>>, %arg3: memref<1x2x128xf32, #tpu.memory_space<vmem>>, %arg4: memref<1x2x128xf32, #tpu.memory_space<vmem>>) attributes {dimension_semantics = [#tpu.dimension_semantics<parallel>, #tpu.dimension_semantics<parallel>], iteration_bounds = array<i64: 2, 1>, scalar_prefetch = 1 : i64, scratch_operands = 0 : i64, tpu.core_type = #tpu.core_type<tc>, window_params = [{transform_indices = @transform_0, window_bounds = array<i64: 1, 2, 128>}, {transform_indices = @transform_1, window_bounds = array<i64: 1, 2, 128>}]} {
    %0 = arith.index_cast %arg0 : i32 to index
    %1 = memref.load %arg2[%0] : memref<2xf32, #tpu.memory_space<smem>>
    %cst = arith.constant 5.000000e-01 : f32
    %2 = arith.addf %cst, %1 : f32
    %3 = math.floor %2 : f32
    %cst_0 = arith.constant 2.000000e+00 : f32
    %4 = arith.mulf %3, %cst_0 : f32
    %c0 = arith.constant 0 : index
    %c0_1 = arith.constant 0 : index
    %c0_2 = arith.constant 0 : index
    %5 = vector.load %arg3[%c0, %c0_1, %c0_2] : memref<1x2x128xf32, #tpu.memory_space<vmem>>, vector<1x2x128xf32>
    %6 = vector.broadcast %4 : f32 to vector<1x2x128xf32>
    %7 = arith.mulf %5, %6 : vector<1x2x128xf32>
    %c0_3 = arith.constant 0 : index
    %c0_4 = arith.constant 0 : index
    %c0_5 = arith.constant 0 : index
    %8 = vector.load %arg4[%c0_3, %c0_4, %c0_5] : memref<1x2x128xf32, #tpu.memory_space<vmem>>, vector<1x2x128xf32>
    tpu.vector_store %arg4[%c0_3, %c0_4, %c0_5], %7 {strides = array<i32>} : memref<1x2x128xf32, #tpu.memory_space<vmem>>, vector<1x2x128xf32>,
    return
  }
  func.func @transform_0(%arg0: i32, %arg1: i32, %arg2: memref<2xf32, #tpu.memory_space<smem>>) -> (i32, i32, i32) {
    %c0_i32 = arith.constant 0 : i32
    %c0_i32_0 = arith.constant 0 : i32
    return %arg0, %arg1, %c0_i32 : i32, i32, i32
  }
  func.func @transform_1(%arg0: i32, %arg1: i32, %arg2: memref<2xf32, #tpu.memory_space<smem>>) -> (i32, i32, i32) {
    %c0_i32 = arith.constant 0 : i32
    %c0_i32_0 = arith.constant 0 : i32
    return %arg0, %arg1, %c0_i32 : i32, i32, i32
  }
}

</mosaic_0001>

<llo_original>
// kernel: tpu_custom_call.1
$region0: #{tpu_custom_call.1}
  #allocation0 [shape = 'u32[]', space=smem, size = 0x4, offset = 0x4, fixed_abs, tag = 'smem constant byte address 0x4 - core index']
  #allocation1 [shape = 'u32[144,128]{1,0:T(1,128)}', space=vmem, size = 0x12000, scoped, tag = 'internal scratch']
  #allocation2 [shape = 's32[1]{0}', space=sflag, size = 0x4, scoped, tag = 'scoped memory for tpu_custom_call.1']
  #allocation3 [shape = 'u8[512]{0}', space=smem, size = 0x200, scoped, tag = 'prefetched SMEM operand 0']
  %s0 = inlined_call_operand.hbm [shape: f32[2], index: 0, kind: input, shape index: {}]
  %s1 = inlined_call_operand.hbm [shape: f32[2,2,128], index: 1, kind: input, shape index: {}]
  %s2 = inlined_call_operand.hbm [shape: f32[2,2,128], index: 2, kind: output, shape index: {}]
  %s3 = sld [smem:[#allocation0]]
  $region41: #{tpu_custom_call.1} parent=0
    _
  %s5 = ssub.s32 1, %s3
  %s6 = scalar_select 0, %s5, %s3
  %8 = dma.hbm_to_smem %s0, 16, [#allocation3], [#allocation2]
  %9 = dma.done [#allocation2], 16
  %10 = sfence
  $region1: #{tpu_custom_call.1} parent=0
    #allocation4 [shape = 'u8[2048]{0}', space=vmem, size = 0x800, scoped, tag = 'input window, operand 1']
    #allocation5 [shape = 's32[2]{0}', space=sflag, size = 0x8, scoped, tag = 'scoped memory for tpu_custom_call.1']
    #allocation6 [shape = 's32[2]{0}', space=sflag, size = 0x8, scoped, tag = 'scoped memory for tpu_custom_call.1']
    #allocation7 [shape = 'u8[2048]{0}', space=vmem, size = 0x800, scoped, tag = 'output window, operand 0']
    %11 = vsyncpa [#allocation5], 0
    %s12 = scalar_lea.sflag [#allocation5], 1
    %13 = vsyncpa %s12, 0
    %14 = vsyncpa [#allocation6], 0
    %s15 = scalar_lea.sflag [#allocation6], 1
    %16 = vsyncpa %s15, 0
    loop: start=0, step=1, limit=4
    $region2: #{tpu_custom_call.1} parent=1 // loop_pre_header
      _
    $region3: #{tpu_custom_call.1} parent=1 // loop_header
      %s18 = sphi 0, %s22
      %p19 = scmp.ge.s32.totalorder %s18, 4
      %s25 = sphi 0, %s37
      %s26 = sphi 0, %s33
      %s27 = sphi 0, %s25
      %s28 = sphi 0, %s26
      %s29 = sphi 0, %s27
      %s30 = sphi 0, %s28
      %s42 = sphi 0, %s44
      %s45 = sphi 0, %s42
      %s46 = sphi 0, %s45
      %s62 = sphi 0, %s46
      %s70 = sphi 0, %s72
      %s73 = sphi 0, %s70
      %s74 = sphi 0, %s73
      %s90 = sphi 0, %s74
    $region4: #{tpu_custom_call.1} parent=1 // loop_header_branch
      %21 = sbr.rel (%p19) target = $region8
    $region5: #{tpu_custom_call.1} parent=1 // loop_body
      %s23 = ssub.s32 %s18, 1
      %s24 = ssub.s32 %s18, 2
      %s31 = sadd.s32 1, %s26
      %p32 = scmp.ge.s32.totalorder %s31, 1
      %s33 = scalar_select %p32, 0, %s31
      %s34 = sadd.s32 1, %s25
      %s35 = scalar_select %p32, %s34, %s25
      %p36 = scmp.ge.s32.totalorder %s35, 2
      %s37 = scalar_select %p36, 0, %s35
      %s38 = ssub.s32 %s25, %s37
      %s39 = ssub.s32 %s26, %s33
      %s40 = sor.u32 %s38, %s39
      %p41 = scmp.eq.s32.totalorder %s40, 0
      %s43 = sadd.s32 %s42, 1
      %s44 = scalar_select %p41, %s42, %s43
      %p47 = pneg %p41
      %p48 = scmp.eq.s32.totalorder %s18, 1
      %p49 = por %p47, %p48
      %p50 = scmp.ne.s32.totalorder %s42, %s45
      %p51 = scmp.eq.s32.totalorder %s18, 0
      %p52 = por %p50, %p51
      %p53 = scmp.ne.s32.totalorder %s42, %s45
      %p54 = scmp.eq.s32.totalorder %s23, 1
      %p55 = por %p53, %p54
      %p56 = scmp.ne.s32.totalorder %s45, %s46
      %p57 = scmp.eq.s32.totalorder %s23, 0
      %p58 = por %p56, %p57
      %p59 = scmp.ne.s32.totalorder %s45, %s46
      %p60 = scmp.eq.s32.totalorder %s24, 1
      %p61 = por %p59, %p60
      %p63 = scmp.ne.s32.totalorder %s46, %s62
      %p64 = scmp.eq.s32.totalorder %s24, 0
      %p65 = por %p63, %p64
      %s66 = ssub.s32 %s25, %s37
      %s67 = ssub.s32 %s26, %s33
      %s68 = sor.u32 %s66, %s67
      %p69 = scmp.eq.s32.totalorder %s68, 0
      %s71 = sadd.s32 %s70, 1
      %s72 = scalar_select %p69, %s70, %s71
      %p75 = pneg %p69
      %p76 = scmp.eq.s32.totalorder %s18, 1
      %p77 = por %p75, %p76
      %p78 = scmp.ne.s32.totalorder %s70, %s73
      %p79 = scmp.eq.s32.totalorder %s18, 0
      %p80 = por %p78, %p79
      %p81 = scmp.ne.s32.totalorder %s70, %s73
      %p82 = scmp.eq.s32.totalorder %s23, 1
      %p83 = por %p81, %p82
      %p84 = scmp.ne.s32.totalorder %s73, %s74
      %p85 = scmp.eq.s32.totalorder %s23, 0
      %p86 = por %p84, %p85
      %p87 = scmp.ne.s32.totalorder %s73, %s74
      %p88 = scmp.eq.s32.totalorder %s24, 1
      %p89 = por %p87, %p88
      %p91 = scmp.ne.s32.totalorder %s74, %s90
      %p92 = scmp.eq.s32.totalorder %s24, 0
      %p93 = por %p91, %p92
      %p94 = scmp.le.s32.totalorder 1, %s18
      %p95 = scmp.lt.s32.totalorder %s18, 3
      %p96 = pnand %p94, %p95
      %p97 = pneg %p96
      // Predicated region
      $region9: #{tpu_custom_call.1} parent=5 // pred_check
        _
      $region10: #{tpu_custom_call.1} parent=5 // pred_check_branch
        %99 = sbr.rel (%p96) target = $region12
      $region11: #{tpu_custom_call.1} parent=5 // pred_region
        %s100 = ssub.s32 %s18, 1
      $region12: #{tpu_custom_call.1} parent=5 // pred_fallthru
        _
      %p101 = scmp.lt.s32.totalorder %s18, 2
      // Predicated region
      $region13: #{tpu_custom_call.1} parent=5 // pred_check
        %p102 = pneg %p101
      $region14: #{tpu_custom_call.1} parent=5 // pred_check_branch
        %104 = sbr.rel (%p102) target = $region16
      $region15: #{tpu_custom_call.1} parent=5 // pred_region
        // Predicated region
        $region17: #{tpu_custom_call.1} parent=15 // pred_check
          %p105 = pneg %p52
        $region18: #{tpu_custom_call.1} parent=15 // pred_check_branch
          %107 = sbr.rel (%p105) target = $region20
        $region19: #{tpu_custom_call.1} parent=15 // pred_region
          %s108 = sand.u32 %s42, 1
          %s109 = scalar_lea.sflag [#allocation5], %s108
          %s110 = sand.u32 %s42, 1
          %s111 = smul.addr %s110, 2
          %s112 = scalar_lea.vmem [#allocation4], %s111
          %s114 = ssub.s32 32, 32
          %115 = vsyncadd %s109, %s114
          %s116 = sadd.s32 %s26, %s25
          %s117 = smul.addr %s116, 32
          %s118 = scalar_lea.hbm %s1, %s117
          %s120 = sshll.u32 %s112, 4
          %s121 = int_to_ptr.vmem [resolvable:$true] %s120
          %123 = dma.hbm_to_vmem [thread:$0]  %s118, 32, %s121, %s109
        $region20: #{tpu_custom_call.1} parent=15 // pred_fallthru
          _
      $region16: #{tpu_custom_call.1} parent=5 // pred_fallthru
        _
      %p124 = scmp.le.s32.totalorder 1, %s18
      %p125 = scmp.lt.s32.totalorder %s18, 3
      %p126 = pnand %p124, %p125
      %p127 = pneg %p126
      // Predicated region
      $region21: #{tpu_custom_call.1} parent=5 // pred_check
        _
      $region22: #{tpu_custom_call.1} parent=5 // pred_check_branch
        %129 = sbr.rel (%p126) target = $region24
      $region23: #{tpu_custom_call.1} parent=5 // pred_region
        %s130 = ssub.s32 %s18, 1
        %s131 = sand.u32 %s45, 1
        %s132 = scalar_lea.sflag [#allocation5], %s131
        %s133 = sand.u32 %s45, 1
        %s134 = smul.addr %s133, 2
        %s135 = scalar_lea.vmem [#allocation4], %s134
        // Predicated region
        $region25: #{tpu_custom_call.1} parent=23 // pred_check
          %p136 = pneg %p58
        $region26: #{tpu_custom_call.1} parent=23 // pred_check_branch
          %138 = sbr.rel (%p136) target = $region28
        $region27: #{tpu_custom_call.1} parent=23 // pred_region
          %139 = dma.done %s132, 32
        $region28: #{tpu_custom_call.1} parent=23 // pred_fallthru
          _
        %s140 = sand.u32 %s45, 1
        %s141 = scalar_lea.sflag [#allocation5], %s140
        %s142 = sand.u32 %s45, 1
        %s143 = smul.addr %s142, 2
        %s144 = scalar_lea.vmem [#allocation4], %s143
        %p145 = pneg %p58
        %p146 = pneg %p55
        %p147 = pneg %p86
        %p148 = pneg %p83
        %s149 = sand.u32 %s73, 1
        %s150 = scalar_lea.sflag [#allocation6], %s149
        %s151 = sand.u32 %s73, 1
        %s152 = smul.addr %s151, 2
        %s153 = scalar_lea.vmem [#allocation7], %s152
        %s154 = sld [smem:[#allocation3 + %s27]]
        %s155 = sadd.f32 %s154, 0.5
        %s156 = sfloor.f32 %s155
        %s157 = smul.f32 %s156, 2.0
        %v158 = vld [vmem:[%s135] sm:$0x3]
        %v159 = vstv %s157
        %v160 = vmul.f32 %v158, %v159
        %161 = vst [vmem:[%s153] sm:$0x3] %v160
        %s162 = sand.u32 %s73, 1
        %s163 = scalar_lea.sflag [#allocation6], %s162
        %s164 = sand.u32 %s73, 1
        %s165 = smul.addr %s164, 2
        %s166 = scalar_lea.vmem [#allocation7], %s165
        // Predicated region
        $region29: #{tpu_custom_call.1} parent=23 // pred_check
          %p167 = pneg %p83
        $region30: #{tpu_custom_call.1} parent=23 // pred_check_branch
          %169 = sbr.rel (%p167) target = $region32
        $region31: #{tpu_custom_call.1} parent=23 // pred_region
          %s171 = ssub.s32 32, 32
          %172 = vsyncadd %s163, %s171
          %s173 = sadd.s32 %s28, %s27
          %s174 = smul.addr %s173, 32
          %s175 = scalar_lea.hbm %s2, %s174
          %s177 = sshll.u32 %s166, 4
          %s178 = int_to_ptr.vmem [resolvable:$true] %s177
          %180 = dma.vmem_to_hbm [thread:$0]  %s178, 32, %s175, %s163
        $region32: #{tpu_custom_call.1} parent=23 // pred_fallthru
          _
      $region24: #{tpu_custom_call.1} parent=5 // pred_fallthru
        _
      %p181 = scmp.le.s32.totalorder 2, %s18
      // Predicated region
      $region33: #{tpu_custom_call.1} parent=5 // pred_check
        %p182 = pneg %p181
      $region34: #{tpu_custom_call.1} parent=5 // pred_check_branch
        %184 = sbr.rel (%p182) target = $region36
      $region35: #{tpu_custom_call.1} parent=5 // pred_region
        %s185 = ssub.s32 %s18, 2
        // Predicated region
        $region37: #{tpu_custom_call.1} parent=35 // pred_check
          %p186 = pneg %p89
        $region38: #{tpu_custom_call.1} parent=35 // pred_check_branch
          %188 = sbr.rel (%p186) target = $region40
        $region39: #{tpu_custom_call.1} parent=35 // pred_region
          %s189 = sand.u32 %s74, 1
          %s190 = scalar_lea.sflag [#allocation6], %s189
          %s191 = sand.u32 %s74, 1
          %s192 = smul.addr %s191, 2
          %s193 = scalar_lea.vmem [#allocation7], %s192
          %194 = dma.done %s190, 32
        $region40: #{tpu_custom_call.1} parent=35 // pred_fallthru
          _
      $region36: #{tpu_custom_call.1} parent=5 // pred_fallthru
        _
    $region6: #{tpu_custom_call.1} parent=1 // loop_footer
      %s22 = sadd.s32 1, %s18
    $region7: #{tpu_custom_call.1} parent=1 // loop_footer_branch
      %17 = sbr.rel target = $region3
    $region8: #{tpu_custom_call.1} parent=1 // loop_exit
      _
    %195 = vsyncpa [#allocation5], 1
    %s196 = scalar_lea.sflag [#allocation5], 1
    %197 = vsyncpa %s196, 1
    %198 = vsyncpa [#allocation6], 1
    %s199 = scalar_lea.sflag [#allocation6], 1
    %200 = vsyncpa %s199, 1

</llo_original>
